<compile_context>
chip_gen: v7x
topology: tpu7x:2x2x1
jax: 0.10.0
libtpu: 0.0.40
codegen_flags: <defaults>
</compile_context>

<pallas_src>
import jax
import jax.numpy as jnp
import numpy as np
from jax.experimental import pallas as pl
from jax.experimental.pallas import tpu as pltpu

H, W, CIN = 7, 7, 3
N_ACTIONS = 7
EMB = 64                        # image_embedding_size for a 7x7 input
IMG_FLAT = H * W * CIN          # 147
POOL_FLAT = 3 * 3 * 16          # 144
C2_FLAT = 2 * 2 * 32            # 128
OUT_LANES = 128                 # lane-dense output slab width
NEG_BIG = -1.0e30               # mask value for log-softmax over 7 of 128 lanes


# ----------------------------------------------------------------------------
# Kernel: whole forward pass for one batch tile.
# ----------------------------------------------------------------------------
def acmodel_kernel(x_ref, w1_ref, w_ref, b_ref, out_ref):
    f32 = jnp.float32
    bf16 = jnp.bfloat16
    x = x_ref[...]                                   # (Bt, 147) bf16

    # ---- Conv2d(3,16,2x2) + ReLU + MaxPool2d(2x2) -------------------------
    # Four bf16 matmuls, one per pooling-window offset; pooling == max of the
    # four pre-activations (ReLU and max commute).  Bias/max/ReLU in f32.
    # TODO(synk): a fused (Bt,147)@(147,576) variant saves one MXU N-pass but
    # needs non-128-aligned lane slices for the pooling max; keeping the
    # 4-matmul form until a bundle dump shows the relayout is free.
    b1 = b_ref[0:1, :]                               # (1, 144) f32
    z = jnp.dot(x, w1_ref[0], preferred_element_type=f32) + b1
    for k in range(1, 4):
        z = jnp.maximum(z, jnp.dot(x, w1_ref[k], preferred_element_type=f32) + b1)
    pooled = jnp.maximum(z, 0.0).astype(bf16)        # (Bt, 144) = (3,3,16) flat

    # ---- Conv2d(16,32,2x2) + ReLU ------------------------------------------
    y2 = jnp.maximum(
        jnp.dot(pooled, w_ref[0:144, :], preferred_element_type=f32)
        + b_ref[1:2, 0:C2_FLAT], 0.0).astype(bf16)   # (Bt, 128)

    # ---- Conv2d(32,64,2x2) + ReLU -> embedding ------------------------------
    emb = jnp.maximum(
        jnp.dot(y2, w_ref[144:272, 0:EMB], preferred_element_type=f32)
        + b_ref[2:3, 0:EMB], 0.0).astype(bf16)       # (Bt, 64)

    # ---- Fused actor|critic heads -------------------------------------------
    h = jnp.tanh(
        jnp.dot(emb, w_ref[272:336, :], preferred_element_type=f32)
        + b_ref[3:4, 0:128]).astype(bf16)            # (Bt, 128)  tanh in f32

    pre = jnp.dot(h, w_ref[336:464, :], preferred_element_type=f32) \
        + b_ref[4:5, 0:128]                          # (Bt, 128) f32
    # cols 0..6 = actor logits, col 7 = critic value, cols 8..127 = 0.

    # ---- log_softmax over the 7 logit lanes (f32) ---------------------------
    lane = jax.lax.broadcasted_iota(jnp.int32, pre.shape, 1)
    is_logit = lane < N_ACTIONS
    masked = jnp.where(is_logit, pre, NEG_BIG)
    m = jnp.max(masked, axis=-1, keepdims=True)
    lse = m + jnp.log(jnp.sum(jnp.exp(masked - m), axis=-1, keepdims=True))
    out_ref[...] = jnp.where(is_logit, pre - lse, pre).astype(out_ref.dtype)


# ----------------------------------------------------------------------------
# Wrapper
# ----------------------------------------------------------------------------
def _round_up(x, m):
    return ((x + m - 1) // m) * m


def acmodel_forward(image, memory, packed, btile=1024):
    """image: (B, 7, 7, 3) float32 NHWC. Returns (log_probs, value, memory)."""
    w1_slab, w_slab, b_slab = packed
    B = image.shape[0]
    # Lane-dense bf16 input (halves input HBM stream into the kernel).
    x = image.reshape(B, IMG_FLAT).astype(jnp.bfloat16)

    # Tile size: multiple of 16 (bf16 sublane packing), clamped to the batch so
    # small batches don't pad to a full btile (avoids a full-array pad copy).
    bt = min(_round_up(btile, 16), _round_up(B, 16))
    n_tiles = pl.cdiv(B, bt)
    Bp = n_tiles * bt
    if Bp != B:                                     # only the ragged tail pads
        x = jnp.pad(x, ((0, Bp - B), (0, 0)))

    out = pl.pallas_call(
        acmodel_kernel,
        out_shape=jax.ShapeDtypeStruct((Bp, OUT_LANES), jnp.bfloat16),
        grid_spec=pltpu.PrefetchScalarGridSpec(
            num_scalar_prefetch=0,
            grid=(n_tiles,),
            in_specs=[
                pl.BlockSpec((bt, IMG_FLAT), lambda i: (i, 0)),
                pl.BlockSpec(w1_slab.shape, lambda i: (0, 0, 0)),
                pl.BlockSpec(w_slab.shape, lambda i: (0, 0)),
                pl.BlockSpec(b_slab.shape, lambda i: (0, 0)),
            ],
            out_specs=pl.BlockSpec((bt, OUT_LANES), lambda i: (i, 0)),
        ),
        compiler_params=pltpu.CompilerParams(
            dimension_semantics=("parallel",),       # shards tiles over 2 TCs on v7x
            vmem_limit_bytes=40 * 1024 * 1024,       # headroom for large tiles; < v7x 64 MiB
        ),
    )(x, w1_slab, w_slab, b_slab)

    log_probs = out[:B, :N_ACTIONS].astype(jnp.float32)  # Categorical(logits=log_softmax(actor(x)))
    value = out[:B, N_ACTIONS].astype(jnp.float32)        # critic(x).squeeze(1)
    return log_probs, value, memory                       # memory passed through (use_memory=False)


# ----------------------------------------------------------------------------
# Parameter construction (PyTorch layouts) + packing into kernel slabs
# ----------------------------------------------------------------------------
def make_params(key):
    ks = jax.random.split(key, 10)

    def conv_wb(kw, kb, cin, cout):
        w = jax.random.normal(kw, (cout, cin, 2, 2), jnp.float32) * 0.1
        b = jax.random.normal(kb, (cout,), jnp.float32) * 0.1
        return w, b

    def linear_wb(k, fin, fout):
        # init_params: normal(0,1), rows normalized over fan-in, zero bias.
        w = jax.random.normal(k, (fout, fin), jnp.float32)
        w = w / jnp.sqrt(jnp.sum(w * w, axis=1, keepdims=True))
        return w, jnp.zeros((fout,), jnp.float32)

    Wc1, b1 = conv_wb(ks[0], ks[1], CIN, 16)
    Wc2, b2 = conv_wb(ks[2], ks[3], 16, 32)
    Wc3, b3 = conv_wb(ks[4], ks[5], 32, 64)
    wa1, ba1 = linear_wb(ks[6], EMB, 64)
    wa2, ba2 = linear_wb(ks[7], 64, N_ACTIONS)
    wcr1, bcr1 = linear_wb(ks[8], EMB, 64)
    wcr2, bcr2 = linear_wb(ks[9], 64, 1)
    return (Wc1, b1, Wc2, b2, Wc3, b3, wa1, ba1, wa2, ba2, wcr1, bcr1, wcr2, bcr2)


def pack_params(params):
    (Wc1, b1, Wc2, b2, Wc3, b3,
     wa1, ba1, wa2, ba2, wcr1, bcr1, wcr2, bcr2) = params
    f32 = jnp.float32

    # --- conv1 -> 4 dense (147, 144) matrices, one per 2x2 pooling offset ----
    h_in = jnp.arange(7)
    p_out = jnp.arange(3)
    k_off = jnp.arange(2)

    def make_sel(pool_off):
        # sel[kh, h, ph] = 1 if h == 2*ph + pool_off + kh
        return (h_in[None, :, None] ==
                2 * p_out[None, None, :] + pool_off + k_off[:, None, None]).astype(f32)

    w1_list = []
    for kph in range(2):
        for kpw in range(2):
            Hs = make_sel(kph)                 # (kh, h, ph)
            Ws = make_sel(kpw)                 # (kw, w, pw)
            # Wc1: (co, ci, kh, kw) -> dense (h, w, ci, ph, pw, co)
            w1k = jnp.einsum('ahp,bwq,ocab->hwcpqo', Hs, Ws, Wc1).reshape(IMG_FLAT, POOL_FLAT)
            w1_list.append(w1k)
    w1_slab = jnp.stack(w1_list, axis=0)       # (4, 147, 144)

    # --- conv2 -> dense (144, 128): (ph,pw,ci) -> (h2,w2,c2) ------------------
    p_in2 = jnp.arange(3)
    h_out2 = jnp.arange(2)
    sel2 = (p_in2[None, :, None] ==
            h_out2[None, None, :] + k_off[:, None, None]).astype(f32)   # (kh, p, h2)
    w2d = jnp.einsum('aph,bqw,ocab->pqchwo', sel2, sel2, Wc2).reshape(POOL_FLAT, C2_FLAT)

    # --- conv3 -> dense (128, 64) (exact: kernel covers the whole 2x2 map) ----
    w3d = jnp.transpose(Wc3, (2, 3, 1, 0)).reshape(C2_FLAT, EMB)        # (kh,kw,ci)->c3

    # --- fused heads ----------------------------------------------------------
    wh1 = jnp.concatenate([wa1.T, wcr1.T], axis=1)                      # (64, 128)
    wh2 = jnp.zeros((128, 128), f32)
    wh2 = wh2.at[0:64, 0:N_ACTIONS].set(wa2.T)                          # actor logits
    wh2 = wh2.at[64:128, N_ACTIONS:N_ACTIONS + 1].set(wcr2.T)           # critic value

    # --- weight slab (464, 128) ----------------------------------------------
    w3d_pad = jnp.zeros((C2_FLAT, 128), f32).at[:, 0:EMB].set(w3d)
    w_slab = jnp.concatenate([w2d, w3d_pad, wh1, wh2], axis=0)          # 144+128+64+128

    # --- bias slab (5, 144), kept in f32 --------------------------------------
    def pad144(v):
        return jnp.zeros((POOL_FLAT,), f32).at[:v.shape[0]].set(v)

    bh2 = jnp.zeros((128,), f32).at[0:N_ACTIONS].set(ba2).at[N_ACTIONS].set(bcr2[0])
    b_slab = jnp.stack([
        jnp.tile(b1, 9),                       # conv1 bias, tiled over (ph,pw)
        pad144(jnp.tile(b2, 4)),               # conv2 bias, tiled over (h2,w2)
        pad144(b3),                            # conv3 bias
        pad144(jnp.concatenate([ba1, bcr1])),  # fused head-1 bias
        pad144(bh2),                           # fused head-2 bias
    ], axis=0)                                 # (5, 144)

    # MXU operands in bf16 (native dtype), biases stay f32.
    return w1_slab.astype(jnp.bfloat16), w_slab.astype(jnp.bfloat16), b_slab


# ----------------------------------------------------------------------------
# Pure-JAX reference (straight port of the PyTorch forward) for sanity check
# ----------------------------------------------------------------------------
def reference_forward(image, params):
    (Wc1, b1, Wc2, b2, Wc3, b3,
     wa1, ba1, wa2, ba2, wcr1, bcr1, wcr2, bcr2) = params
    dn = ("NHWC", "OIHW", "NHWC")

    def conv_relu(x, w, b):
        y = jax.lax.conv_general_dilated(x, w, (1, 1), "VALID", dimension_numbers=dn)
        return jnp.maximum(y + b.reshape(1, 1, 1, -1), 0.0)

    y = conv_relu(image, Wc1, b1)
    y = jax.lax.reduce_window(y, -jnp.inf, jax.lax.max,
                              (1, 2, 2, 1), (1, 2, 2, 1), "VALID")
    y = conv_relu(y, Wc2, b2)
    y = conv_relu(y, Wc3, b3)
    emb = y.reshape(y.shape[0], -1)
    logits = jnp.tanh(emb @ wa1.T + ba1) @ wa2.T + ba2
    logp = jax.nn.log_softmax(logits, axis=-1)
    value = (jnp.tanh(emb @ wcr1.T + bcr1) @ wcr2.T + bcr2)[:, 0]
    return logp, value


if __name__ == "__main__":
    key = jax.random.PRNGKey(0)
    k_img, k_par = jax.random.split(key)

    params = make_params(k_par)
    packed = pack_params(params)

    # Tolerances account for bf16 matmul operands + bf16 output (reference is f32).
    RTOL, ATOL = 5e-2, 5e-2

    # Small example batch (MiniGrid-style observations 0..10).
    B = 2
    image = jax.random.uniform(k_img, (B, H, W, CIN), jnp.float32, 0.0, 10.0)
    memory = jnp.zeros((B, 2 * EMB), jnp.float32)   # memory_size = 2 * semi_memory_size

    log_probs, value, memory_out = acmodel_forward(image, memory, packed)
    jax.block_until_ready((log_probs, value, memory_out))

    ref_logp, ref_value = reference_forward(image, params)
    assert log_probs.shape == (B, N_ACTIONS) and value.shape == (B,)
    assert np.allclose(np.asarray(log_probs), np.asarray(ref_logp),
                       rtol=RTOL, atol=ATOL), "log-prob mismatch vs reference"
    assert np.allclose(np.asarray(value), np.asarray(ref_value),
                       rtol=RTOL, atol=ATOL), "value mismatch vs reference"

    # Larger, ragged rollout batch: exercises padding of the tail + a multi-tile
    # grid (2 parallel tiles at btile=1024).
    B2 = 2000
    image2 = jax.random.uniform(jax.random.PRNGKey(1), (B2, H, W, CIN),
                                jnp.float32, 0.0, 10.0)
    lp2, v2, _ = acmodel_forward(image2, jnp.zeros((B2, 2 * EMB), jnp.float32),
                                 packed, btile=1024)
    jax.block_until_ready((lp2, v2))
    r_lp2, r_v2 = reference_forward(image2, params)
    assert np.allclose(np.asarray(lp2), np.asarray(r_lp2), rtol=RTOL, atol=ATOL)
    assert np.allclose(np.asarray(v2), np.asarray(r_v2), rtol=RTOL, atol=ATOL)

    print("KERNEL_OK")
</pallas_src>

<mosaic_0001>
module attributes {stable_mosaic.version = 11 : i64} {
  func.func @acmodel_kernel(%arg0: i32, %arg1: memref<16x147xbf16, #tpu.memory_space<vmem>>, %arg2: memref<4x147x144xbf16, #tpu.memory_space<vmem>>, %arg3: memref<464x128xbf16, #tpu.memory_space<vmem>>, %arg4: memref<5x144xf32, #tpu.memory_space<vmem>>, %arg5: memref<16x128xbf16, #tpu.memory_space<vmem>>) attributes {dimension_semantics = [#tpu.dimension_semantics<parallel>], iteration_bounds = array<i64: 1>, scalar_prefetch = 0 : i64, scratch_operands = 0 : i64, tpu.core_type = #tpu.core_type<tc>, window_params = [{transform_indices = @transform_0, window_bounds = array<i64: 16, 147>}, {pipeline_mode = #tpu.pipeline_mode<synchronous>, transform_indices = @transform_1, window_bounds = array<i64: 4, 147, 144>}, {pipeline_mode = #tpu.pipeline_mode<synchronous>, transform_indices = @transform_2, window_bounds = array<i64: 464, 128>}, {pipeline_mode = #tpu.pipeline_mode<synchronous>, transform_indices = @transform_3, window_bounds = array<i64: 5, 144>}, {transform_indices = @transform_4, window_bounds = array<i64: 16, 128>}]} {
    %c0 = arith.constant 0 : index
    %c0_0 = arith.constant 0 : index
    %0 = vector.load %arg1[%c0, %c0_0] : memref<16x147xbf16, #tpu.memory_space<vmem>>, vector<16x147xbf16>
    %c0_1 = arith.constant 0 : index
    %c0_2 = arith.constant 0 : index
    %1 = vector.load %arg4[%c0_1, %c0_2] : memref<5x144xf32, #tpu.memory_space<vmem>>, vector<1x144xf32>
    %c0_3 = arith.constant 0 : index
    %c0_4 = arith.constant 0 : index
    %c0_5 = arith.constant 0 : index
    %2 = vector.load %arg2[%c0_3, %c0_4, %c0_5] : memref<4x147x144xbf16, #tpu.memory_space<vmem>>, vector<1x147x144xbf16>
    %3 = vector.shape_cast %2 : vector<1x147x144xbf16> to vector<147x144xbf16>
    %cst = arith.constant dense<0.000000e+00> : vector<16x144xf32>
    %4 = tpu.matmul %0, %3, %cst {dimension_numbers = #tpu.dot_dimension_numbers<[1], [0], [0], [1], [0, 0, 1, 1], [], []>} : vector<16x147xbf16>, vector<147x144xbf16>, vector<16x144xf32> -> vector<16x144xf32>
    %5 = vector.broadcast %1 : vector<1x144xf32> to vector<16x144xf32>
    %6 = arith.addf %4, %5 : vector<16x144xf32>
    %c1 = arith.constant 1 : index
    %c0_6 = arith.constant 0 : index
    %c0_7 = arith.constant 0 : index
    %7 = vector.load %arg2[%c1, %c0_6, %c0_7] : memref<4x147x144xbf16, #tpu.memory_space<vmem>>, vector<1x147x144xbf16>
    %8 = vector.shape_cast %7 : vector<1x147x144xbf16> to vector<147x144xbf16>
    %cst_8 = arith.constant dense<0.000000e+00> : vector<16x144xf32>
    %9 = tpu.matmul %0, %8, %cst_8 {dimension_numbers = #tpu.dot_dimension_numbers<[1], [0], [0], [1], [0, 0, 1, 1], [], []>} : vector<16x147xbf16>, vector<147x144xbf16>, vector<16x144xf32> -> vector<16x144xf32>
    %10 = vector.broadcast %1 : vector<1x144xf32> to vector<16x144xf32>
    %11 = arith.addf %9, %10 : vector<16x144xf32>
    %12 = arith.maximumf %6, %11 : vector<16x144xf32>
    %c2 = arith.constant 2 : index
    %c0_9 = arith.constant 0 : index
    %c0_10 = arith.constant 0 : index
    %13 = vector.load %arg2[%c2, %c0_9, %c0_10] : memref<4x147x144xbf16, #tpu.memory_space<vmem>>, vector<1x147x144xbf16>
    %14 = vector.shape_cast %13 : vector<1x147x144xbf16> to vector<147x144xbf16>
    %cst_11 = arith.constant dense<0.000000e+00> : vector<16x144xf32>
    %15 = tpu.matmul %0, %14, %cst_11 {dimension_numbers = #tpu.dot_dimension_numbers<[1], [0], [0], [1], [0, 0, 1, 1], [], []>} : vector<16x147xbf16>, vector<147x144xbf16>, vector<16x144xf32> -> vector<16x144xf32>
    %16 = vector.broadcast %1 : vector<1x144xf32> to vector<16x144xf32>
    %17 = arith.addf %15, %16 : vector<16x144xf32>
    %18 = arith.maximumf %12, %17 : vector<16x144xf32>
    %c3 = arith.constant 3 : index
    %c0_12 = arith.constant 0 : index
    %c0_13 = arith.constant 0 : index
    %19 = vector.load %arg2[%c3, %c0_12, %c0_13] : memref<4x147x144xbf16, #tpu.memory_space<vmem>>, vector<1x147x144xbf16>
    %20 = vector.shape_cast %19 : vector<1x147x144xbf16> to vector<147x144xbf16>
    %cst_14 = arith.constant dense<0.000000e+00> : vector<16x144xf32>
    %21 = tpu.matmul %0, %20, %cst_14 {dimension_numbers = #tpu.dot_dimension_numbers<[1], [0], [0], [1], [0, 0, 1, 1], [], []>} : vector<16x147xbf16>, vector<147x144xbf16>, vector<16x144xf32> -> vector<16x144xf32>
    %22 = vector.broadcast %1 : vector<1x144xf32> to vector<16x144xf32>
    %23 = arith.addf %21, %22 : vector<16x144xf32>
    %24 = arith.maximumf %18, %23 : vector<16x144xf32>
    %cst_15 = arith.constant 0.000000e+00 : f32
    %25 = vector.broadcast %cst_15 : f32 to vector<16x144xf32>
    %26 = arith.maximumf %24, %25 : vector<16x144xf32>
    %27 = arith.truncf %26 : vector<16x144xf32> to vector<16x144xbf16>
    %c0_16 = arith.constant 0 : index
    %c0_17 = arith.constant 0 : index
    %28 = vector.load %arg3[%c0_16, %c0_17] : memref<464x128xbf16, #tpu.memory_space<vmem>>, vector<144x128xbf16>
    %cst_18 = arith.constant dense<0.000000e+00> : vector<16x128xf32>
    %29 = tpu.matmul %27, %28, %cst_18 {dimension_numbers = #tpu.dot_dimension_numbers<[1], [0], [0], [1], [0, 0, 1, 1], [], []>} : vector<16x144xbf16>, vector<144x128xbf16>, vector<16x128xf32> -> vector<16x128xf32>
    %c1_19 = arith.constant 1 : index
    %c0_20 = arith.constant 0 : index
    %30 = vector.load %arg4[%c1_19, %c0_20] : memref<5x144xf32, #tpu.memory_space<vmem>>, vector<1x128xf32>
    %31 = vector.broadcast %30 : vector<1x128xf32> to vector<16x128xf32>
    %32 = arith.addf %29, %31 : vector<16x128xf32>
    %cst_21 = arith.constant 0.000000e+00 : f32
    %33 = vector.broadcast %cst_21 : f32 to vector<16x128xf32>
    %34 = arith.maximumf %32, %33 : vector<16x128xf32>
    %35 = arith.truncf %34 : vector<16x128xf32> to vector<16x128xbf16>
    %c144 = arith.constant 144 : index
    %c0_22 = arith.constant 0 : index
    %36 = vector.load %arg3[%c144, %c0_22] : memref<464x128xbf16, #tpu.memory_space<vmem>>, vector<128x64xbf16>
    %cst_23 = arith.constant dense<0.000000e+00> : vector<16x64xf32>
    %37 = tpu.matmul %35, %36, %cst_23 {dimension_numbers = #tpu.dot_dimension_numbers<[1], [0], [0], [1], [0, 0, 1, 1], [], []>} : vector<16x128xbf16>, vector<128x64xbf16>, vector<16x64xf32> -> vector<16x64xf32>
    %c2_24 = arith.constant 2 : index
    %c0_25 = arith.constant 0 : index
    %38 = vector.load %arg4[%c2_24, %c0_25] : memref<5x144xf32, #tpu.memory_space<vmem>>, vector<1x64xf32>
    %39 = vector.broadcast %38 : vector<1x64xf32> to vector<16x64xf32>
    %40 = arith.addf %37, %39 : vector<16x64xf32>
    %cst_26 = arith.constant 0.000000e+00 : f32
    %41 = vector.broadcast %cst_26 : f32 to vector<16x64xf32>
    %42 = arith.maximumf %40, %41 : vector<16x64xf32>
    %43 = arith.truncf %42 : vector<16x64xf32> to vector<16x64xbf16>
    %c272 = arith.constant 272 : index
    %c0_27 = arith.constant 0 : index
    %44 = vector.load %arg3[%c272, %c0_27] : memref<464x128xbf16, #tpu.memory_space<vmem>>, vector<64x128xbf16>
    %cst_28 = arith.constant dense<0.000000e+00> : vector<16x128xf32>
    %45 = tpu.matmul %43, %44, %cst_28 {dimension_numbers = #tpu.dot_dimension_numbers<[1], [0], [0], [1], [0, 0, 1, 1], [], []>} : vector<16x64xbf16>, vector<64x128xbf16>, vector<16x128xf32> -> vector<16x128xf32>
    %c3_29 = arith.constant 3 : index
    %c0_30 = arith.constant 0 : index
    %46 = vector.load %arg4[%c3_29, %c0_30] : memref<5x144xf32, #tpu.memory_space<vmem>>, vector<1x128xf32>
    %47 = vector.broadcast %46 : vector<1x128xf32> to vector<16x128xf32>
    %48 = arith.addf %45, %47 : vector<16x128xf32>
    %49 = math.tanh %48 : vector<16x128xf32>
    %50 = arith.truncf %49 : vector<16x128xf32> to vector<16x128xbf16>
    %c336 = arith.constant 336 : index
    %c0_31 = arith.constant 0 : index
    %51 = vector.load %arg3[%c336, %c0_31] : memref<464x128xbf16, #tpu.memory_space<vmem>>, vector<128x128xbf16>
    %cst_32 = arith.constant dense<0.000000e+00> : vector<16x128xf32>
    %52 = tpu.matmul %50, %51, %cst_32 {dimension_numbers = #tpu.dot_dimension_numbers<[1], [0], [0], [1], [0, 0, 1, 1], [], []>} : vector<16x128xbf16>, vector<128x128xbf16>, vector<16x128xf32> -> vector<16x128xf32>
    %c4 = arith.constant 4 : index
    %c0_33 = arith.constant 0 : index
    %53 = vector.load %arg4[%c4, %c0_33] : memref<5x144xf32, #tpu.memory_space<vmem>>, vector<1x128xf32>
    %54 = vector.broadcast %53 : vector<1x128xf32> to vector<16x128xf32>
    %55 = arith.addf %52, %54 : vector<16x128xf32>
    %56 = tpu.iota {dimensions = array<i32: 1>} : vector<16x128xi32>
    %c7_i32 = arith.constant 7 : i32
    %57 = vector.broadcast %c7_i32 : i32 to vector<16x128xi32>
    %58 = arith.cmpi slt, %56, %57 : vector<16x128xi32>
    %cst_34 = arith.constant -1.000000e+30 : f32
    %59 = vector.broadcast %cst_34 : f32 to vector<16x128xf32>
    %60 = arith.select %58, %55, %59 : vector<16x128xi1>, vector<16x128xf32>
    %cst_35 = arith.constant dense<0xFF800000> : vector<16xf32>
    %61 = vector.multi_reduction <maximumf>, %60, %cst_35 [1] : vector<16x128xf32> to vector<16xf32>
    %62 = vector.shape_cast %61 : vector<16xf32> to vector<16x1xf32>
    %63 = vector.broadcast %62 : vector<16x1xf32> to vector<16x128xf32>
    %64 = arith.subf %60, %63 : vector<16x128xf32>
    %65 = math.exp %64 : vector<16x128xf32>
    %cst_36 = arith.constant dense<0.000000e+00> : vector<16xf32>
    %66 = vector.multi_reduction <add>, %65, %cst_36 [1] : vector<16x128xf32> to vector<16xf32>
    %67 = vector.shape_cast %66 : vector<16xf32> to vector<16x1xf32>
    %68 = math.log %67 : vector<16x1xf32>
    %69 = arith.addf %62, %68 : vector<16x1xf32>
    %70 = vector.broadcast %69 : vector<16x1xf32> to vector<16x128xf32>
    %71 = arith.subf %55, %70 : vector<16x128xf32>
    %72 = arith.select %58, %71, %55 : vector<16x128xi1>, vector<16x128xf32>
    %73 = arith.truncf %72 : vector<16x128xf32> to vector<16x128xbf16>
    %c0_37 = arith.constant 0 : index
    %c0_38 = arith.constant 0 : index
    %74 = vector.load %arg5[%c0_37, %c0_38] : memref<16x128xbf16, #tpu.memory_space<vmem>>, vector<16x128xbf16>
    tpu.vector_store %arg5[%c0_37, %c0_38], %73 {strides = array<i32>} : memref<16x128xbf16, #tpu.memory_space<vmem>>, vector<16x128xbf16>,
    return
  }
  func.func @transform_0(%arg0: i32) -> (i32, i32) {
    %c0_i32 = arith.constant 0 : i32
    %c0_i32_0 = arith.constant 0 : i32
    return %arg0, %c0_i32 : i32, i32
  }
  func.func @transform_1(%arg0: i32) -> (i32, i32, i32) {
    %c0_i32 = arith.constant 0 : i32
    %c0_i32_0 = arith.constant 0 : i32
    %c0_i32_1 = arith.constant 0 : i32
    %c0_i32_2 = arith.constant 0 : i32
    return %c0_i32, %c0_i32_0, %c0_i32_1 : i32, i32, i32
  }
  func.func @transform_2(%arg0: i32) -> (i32, i32) {
    %c0_i32 = arith.constant 0 : i32
    %c0_i32_0 = arith.constant 0 : i32
    %c0_i32_1 = arith.constant 0 : i32
    return %c0_i32, %c0_i32_0 : i32, i32
  }
  func.func @transform_3(%arg0: i32) -> (i32, i32) {
    %c0_i32 = arith.constant 0 : i32
    %c0_i32_0 = arith.constant 0 : i32
    %c0_i32_1 = arith.constant 0 : i32
    return %c0_i32, %c0_i32_0 : i32, i32
  }
  func.func @transform_4(%arg0: i32) -> (i32, i32) {
    %c0_i32 = arith.constant 0 : i32
    %c0_i32_0 = arith.constant 0 : i32
    return %arg0, %c0_i32 : i32, i32
  }
}

</mosaic_0001>

<llo_original>
// kernel: tpu_custom_call.1
$region0: #{tpu_custom_call.1}
  #allocation0 [shape = 'u32[]', space=smem, size = 0x4, offset = 0x4, fixed_abs, tag = 'smem constant byte address 0x4 - core index']
  #allocation1 [shape = 'u32[144,128]{1,0:T(1,128)}', space=vmem, size = 0x12000, scoped, tag = 'internal scratch']
  %s0 = inlined_call_operand.vmem [shape: bf16[16,147], index: 0, kind: input, shape index: {}]
  %s1 = inlined_call_operand.vmem [shape: bf16[4,147,144], index: 1, kind: input, shape index: {}]
  %s2 = inlined_call_operand.vmem [shape: bf16[464,128], index: 2, kind: input, shape index: {}]
  %s3 = inlined_call_operand.vmem [shape: f32[5,144], index: 3, kind: input, shape index: {}]
  %s4 = inlined_call_operand.hbm [shape: bf16[16,128], index: 4, kind: output, shape index: {}]
  %s5 = sld [smem:[#allocation0]]
  $region26: #{tpu_custom_call.1} parent=0
    _
  %s7 = ssub.s32 1, %s5
  %s8 = scalar_select 0, %s7, %s5
  $region1: #{tpu_custom_call.1} parent=0
    #allocation2 [shape = 'u8[4096]{0}', space=vmem, size = 0x1000, scoped, tag = 'output window, operand 0, single buffered']
    #allocation3 [shape = 's32[1]{0}', space=sflag, size = 0x4, scoped, tag = 'scoped memory for tpu_custom_call.1']
    %9 = vsyncpa [#allocation3], 0
    // Predicated region
    $region2: #{tpu_custom_call.1} parent=1 // pred_check
      _
    $region3: #{tpu_custom_call.1} parent=1 // pred_check_branch
      %11 = sbr.rel (0) target = $region5
    $region4: #{tpu_custom_call.1} parent=1 // pred_region
      _
    $region5: #{tpu_custom_call.1} parent=1 // pred_fallthru
      _
    // Predicated region
    $region6: #{tpu_custom_call.1} parent=1 // pred_check
      _
    $region7: #{tpu_custom_call.1} parent=1 // pred_check_branch
      %13 = sbr.rel (0) target = $region9
    $region8: #{tpu_custom_call.1} parent=1 // pred_region
      _
    $region9: #{tpu_custom_call.1} parent=1 // pred_fallthru
      _
    // Predicated region
    $region10: #{tpu_custom_call.1} parent=1 // pred_check
      _
    $region11: #{tpu_custom_call.1} parent=1 // pred_check_branch
      %15 = sbr.rel (0) target = $region13
    $region12: #{tpu_custom_call.1} parent=1 // pred_region
      _
    $region13: #{tpu_custom_call.1} parent=1 // pred_fallthru
      _
    // Predicated region
    $region14: #{tpu_custom_call.1} parent=1 // pred_check
      _
    $region15: #{tpu_custom_call.1} parent=1 // pred_check_branch
      %17 = sbr.rel (0) target = $region17
    $region16: #{tpu_custom_call.1} parent=1 // pred_region
      _
    $region17: #{tpu_custom_call.1} parent=1 // pred_fallthru
      _
    %v19 = vld [vmem:[%s0] sm:$0xff]
    %v20 = vld [vmem:[%s0 + $0x8] sm:$0xff]
    %v21 = vld [vmem:[%s3] ss:$8 sm:$0x3]
    %v22 = vld [vmem:[%s1] sm:$0xff]
    %v23 = vld [vmem:[%s1 + $0x8] sm:$0xff]
    %v24 = vld [vmem:[%s1 + $0x10] sm:$0xff]
    %v25 = vld [vmem:[%s1 + $0x18] sm:$0xff]
    %v26 = vld [vmem:[%s1 + $0x20] sm:$0xff]
    %v27 = vld [vmem:[%s1 + $0x28] sm:$0xff]
    %v28 = vld [vmem:[%s1 + $0x30] sm:$0xff]
    %v29 = vld [vmem:[%s1 + $0x38] sm:$0xff]
    %v30 = vld [vmem:[%s1 + $0x40] sm:$0xff]
    %v31 = vld [vmem:[%s1 + $0x48] sm:$0xff]
    %v32 = vld [vmem:[%s1 + $0x50] sm:$0xff]
    %v33 = vld [vmem:[%s1 + $0x58] sm:$0xff]
    %v34 = vld [vmem:[%s1 + $0x60] sm:$0xff]
    %v35 = vld [vmem:[%s1 + $0x68] sm:$0xff]
    %v36 = vld [vmem:[%s1 + $0x70] sm:$0xff]
    %v37 = vld [vmem:[%s1 + $0x78] sm:$0xff]
    %v38 = vld [vmem:[%s1 + $0x80] sm:$0xff]
    %v39 = vld [vmem:[%s1 + $0x88] sm:$0xff]
    %v40 = vld [vmem:[%s1 + $0x90] sm:$0x33]
    %v42 = vlaneseq
    %v43 = vshrl.u32 %v42, 7
    %v44 = vsub.s32 0, %v43
    %v45 = vrot.slane %v21, %v44
    %v46 = vlaneseq
    %v47 = vshrl.u32 %v46, 7
    %v48 = vsub.s32 1, %v47
    %v49 = vrot.slane %v21, %v48
    %v54 = vunpack.c.l.b16 %v19
    %v55 = vunpack.c.h.b16 %v19
    %v56 = vunpack.c.l.b16 %v20
    %v57 = vunpack.c.h.b16 %v20
    %v58 = vpack.c.b16 %v56, %v54
    %v59 = vpack.c.b16 %v57, %v55
    %v80 = vunpack.c.l.b16 %v22
    %v81 = vunpack.c.h.b16 %v22
    %v82 = vunpack.c.l.b16 %v23
    %v83 = vunpack.c.h.b16 %v23
    %v84 = vunpack.c.l.b16 %v24
    %v85 = vunpack.c.h.b16 %v24
    %v86 = vunpack.c.l.b16 %v25
    %v87 = vunpack.c.h.b16 %v25
    %v88 = vunpack.c.l.b16 %v26
    %v89 = vunpack.c.h.b16 %v26
    %v90 = vunpack.c.l.b16 %v27
    %v91 = vunpack.c.h.b16 %v27
    %v92 = vunpack.c.l.b16 %v28
    %v93 = vunpack.c.h.b16 %v28
    %v94 = vunpack.c.l.b16 %v29
    %v95 = vunpack.c.h.b16 %v29
    %v96 = vunpack.c.l.b16 %v30
    %v97 = vunpack.c.h.b16 %v30
    %v98 = vunpack.c.l.b16 %v31
    %v99 = vunpack.c.h.b16 %v31
    %v100 = vunpack.c.l.b16 %v32
    %v101 = vunpack.c.h.b16 %v32
    %v102 = vunpack.c.l.b16 %v33
    %v103 = vunpack.c.h.b16 %v33
    %v104 = vunpack.c.l.b16 %v34
    %v105 = vunpack.c.h.b16 %v34
    %v106 = vunpack.c.l.b16 %v35
    %v107 = vunpack.c.h.b16 %v35
    %v108 = vunpack.c.l.b16 %v36
    %v109 = vunpack.c.h.b16 %v36
    %v110 = vunpack.c.l.b16 %v37
    %v111 = vunpack.c.h.b16 %v37
    %v112 = vunpack.c.l.b16 %v38
    %v113 = vunpack.c.h.b16 %v38
    %v114 = vunpack.c.l.b16 %v39
    %v115 = vunpack.c.h.b16 %v39
    %v116 = vunpack.c.l.b16 %v40
    %v117 = vunpack.c.h.b16 %v40
    %v118 = vpack.c.b16 %v82, %v80
    %v119 = vpack.c.b16 %v83, %v81
    %v120 = vpack.c.b16 %v86, %v84
    %v121 = vpack.c.b16 %v87, %v85
    %v122 = vpack.c.b16 %v90, %v88
    %v123 = vpack.c.b16 %v91, %v89
    %v124 = vpack.c.b16 %v94, %v92
    %v125 = vpack.c.b16 %v95, %v93
    %v126 = vpack.c.b16 %v98, %v96
    %v127 = vpack.c.b16 %v99, %v97
    %v128 = vpack.c.b16 %v102, %v100
    %v129 = vpack.c.b16 %v103, %v101
    %v130 = vpack.c.b16 %v106, %v104
    %v131 = vpack.c.b16 %v107, %v105
    %v132 = vpack.c.b16 %v110, %v108
    %v133 = vpack.c.b16 %v111, %v109
    %v134 = vpack.c.b16 %v114, %v112
    %v135 = vpack.c.b16 %v115, %v113
    %v136 = vpack.c.b16 %v116, %v116
    %v137 = vpack.c.b16 %v117, %v117
    %vm156 = vcmask 154624
    %v158 = vsel %vm156, %v59, 0
    %vm160 = vcmask 1040384
    %vm161 = vcmask 1041408
    %v162 = vsel %vm160, 4294967295, 65535
    %v163 = vsel %vm161, %v162, 0
    %v165 = vand.u32 %v136, %v163
    %v168 = vand.u32 %v137, %v163
    %170 = vmatprep.subr.bf16.mxu0 %v119
    %171 = vmatpush1.bf16.msra.mxu0 %v118
    %172 = vmatprep.subr.bf16.mxu0 %v121
    %173 = vmatpush1.bf16.msra.mxu0 %v120
    %174 = vmatprep.subr.bf16.mxu0 %v123
    %175 = vmatpush1.bf16.msra.mxu0 %v122
    %176 = vmatprep.subr.bf16.mxu0 %v125
    %177 = vmatpush1.bf16.msra.mxu0 %v124
    %178 = vmatprep.subr.bf16.mxu0 %v127
    %179 = vmatpush1.bf16.msra.mxu0 %v126
    %180 = vmatprep.subr.bf16.mxu0 %v129
    %181 = vmatpush1.bf16.msra.mxu0 %v128
    %182 = vmatprep.subr.bf16.mxu0 %v131
    %183 = vmatpush1.bf16.msra.mxu0 %v130
    %184 = vmatprep.subr.bf16.mxu0 %v133
    %185 = vmatpush1.bf16.msra.mxu0 %v132
    %186 = vmatprep.subr.bf16.mxu0 %v135
    %187 = vmatpush1.bf16.msra.mxu0 %v134
    %188 = vmatprep.subr.bf16.mxu0 %v168
    %189 = vmatpush1.bf16.msra.mxu0 %v165
    %190 = vmatprep.subr.bf16.mxu0 0
    %191 = vmatpush1.bf16.msra.mxu0 0
    %192 = vmatprep.subr.bf16.mxu0 0
    %193 = vmatpush1.bf16.msra.mxu0 0
    %194 = vmatprep.subr.bf16.mxu0 0
    %195 = vmatpush1.bf16.msra.mxu0 0
    %196 = vmatprep.subr.bf16.mxu0 0
    %197 = vmatpush1.bf16.msra.mxu0 0
    %198 = vmatprep.subr.bf16.mxu0 0
    %199 = vmatpush1.bf16.msra.mxu0 0
    %200 = vmatprep.subr.bf16.mxu0 0
    %201 = vmatpush1.bf16.msra.mxu0 0
    %202 = vmatprep.mubr.bf16.mxu0 %v158
    %203 = vmatmul.mubr.bf16.gmra.mrb[0].mxu0 %v58
    %v204 = vpop.f32.mrb[0].mxu0
    %v205 = vadd.f32 %v45, %v204
    %v206 = vpop.f32.mrb[0].mxu0
    %v207 = vadd.f32 %v49, %v206
    %v208 = vpop.f32.mrb[0].mxu0
    %v209 = vadd.f32 %v45, %v208
    %v210 = vpop.f32.mrb[0].mxu0
    %v211 = vadd.f32 %v49, %v210
    %212 = vdwg.mxu0
    %s213 = scalar_lea.vmem %s1, 152
    %v214 = vld [vmem:[%s213] sm:$0xff]
    %v215 = vld [vmem:[%s213 + $0x8] sm:$0xff]
    %v216 = vld [vmem:[%s213 + $0x10] sm:$0xff]
    %v217 = vld [vmem:[%s213 + $0x18] sm:$0xff]
    %v218 = vld [vmem:[%s213 + $0x20] sm:$0xff]
    %v219 = vld [vmem:[%s213 + $0x28] sm:$0xff]
    %v220 = vld [vmem:[%s213 + $0x30] sm:$0xff]
    %v221 = vld [vmem:[%s213 + $0x38] sm:$0xff]
    %v222 = vld [vmem:[%s213 + $0x40] sm:$0xff]
    %v223 = vld [vmem:[%s213 + $0x48] sm:$0xff]
    %v224 = vld [vmem:[%s213 + $0x50] sm:$0xff]
    %v225 = vld [vmem:[%s213 + $0x58] sm:$0xff]
    %v226 = vld [vmem:[%s213 + $0x60] sm:$0xff]
    %v227 = vld [vmem:[%s213 + $0x68] sm:$0xff]
    %v228 = vld [vmem:[%s213 + $0x70] sm:$0xff]
    %v229 = vld [vmem:[%s213 + $0x78] sm:$0xff]
    %v230 = vld [vmem:[%s213 + $0x80] sm:$0xff]
    %v231 = vld [vmem:[%s213 + $0x88] sm:$0xff]
    %v232 = vld [vmem:[%s213 + $0x90] sm:$0x33]
    %v252 = vunpack.c.l.b16 %v214
    %v253 = vunpack.c.h.b16 %v214
    %v254 = vunpack.c.l.b16 %v215
    %v255 = vunpack.c.h.b16 %v215
    %v256 = vunpack.c.l.b16 %v216
    %v257 = vunpack.c.h.b16 %v216
    %v258 = vunpack.c.l.b16 %v217
    %v259 = vunpack.c.h.b16 %v217
    %v260 = vunpack.c.l.b16 %v218
    %v261 = vunpack.c.h.b16 %v218
    %v262 = vunpack.c.l.b16 %v219
    %v263 = vunpack.c.h.b16 %v219
    %v264 = vunpack.c.l.b16 %v220
    %v265 = vunpack.c.h.b16 %v220
    %v266 = vunpack.c.l.b16 %v221
    %v267 = vunpack.c.h.b16 %v221
    %v268 = vunpack.c.l.b16 %v222
    %v269 = vunpack.c.h.b16 %v222
    %v270 = vunpack.c.l.b16 %v223
    %v271 = vunpack.c.h.b16 %v223
    %v272 = vunpack.c.l.b16 %v224
    %v273 = vunpack.c.h.b16 %v224
    %v274 = vunpack.c.l.b16 %v225
    %v275 = vunpack.c.h.b16 %v225
    %v276 = vunpack.c.l.b16 %v226
    %v277 = vunpack.c.h.b16 %v226
    %v278 = vunpack.c.l.b16 %v227
    %v279 = vunpack.c.h.b16 %v227
    %v280 = vunpack.c.l.b16 %v228
    %v281 = vunpack.c.h.b16 %v228
    %v282 = vunpack.c.l.b16 %v229
    %v283 = vunpack.c.h.b16 %v229
    %v284 = vunpack.c.l.b16 %v230
    %v285 = vunpack.c.h.b16 %v230
    %v286 = vunpack.c.l.b16 %v231
    %v287 = vunpack.c.h.b16 %v231
    %v288 = vunpack.c.l.b16 %v232
    %v289 = vunpack.c.h.b16 %v232
    %v290 = vpack.c.b16 %v254, %v252
    %v291 = vpack.c.b16 %v255, %v253
    %v292 = vpack.c.b16 %v258, %v256
    %v293 = vpack.c.b16 %v259, %v257
    %v294 = vpack.c.b16 %v262, %v260
    %v295 = vpack.c.b16 %v263, %v261
    %v296 = vpack.c.b16 %v266, %v264
    %v297 = vpack.c.b16 %v267, %v265
    %v298 = vpack.c.b16 %v270, %v268
    %v299 = vpack.c.b16 %v271, %v269
    %v300 = vpack.c.b16 %v274, %v272
    %v301 = vpack.c.b16 %v275, %v273
    %v302 = vpack.c.b16 %v278, %v276
    %v303 = vpack.c.b16 %v279, %v277
    %v304 = vpack.c.b16 %v282, %v280
    %v305 = vpack.c.b16 %v283, %v281
    %v306 = vpack.c.b16 %v286, %v284
    %v307 = vpack.c.b16 %v287, %v285
    %v308 = vpack.c.b16 %v288, %v288
    %v309 = vpack.c.b16 %v289, %v289
    %v329 = vand.u32 %v308, %v163
    %v332 = vand.u32 %v309, %v163
    %334 = vmatprep.subr.bf16.mxu0 %v291
    %335 = vmatpush1.bf16.msra.mxu0 %v290
    %336 = vmatprep.subr.bf16.mxu0 %v293
    %337 = vmatpush1.bf16.msra.mxu0 %v292
    %338 = vmatprep.subr.bf16.mxu0 %v295
    %339 = vmatpush1.bf16.msra.mxu0 %v294
    %340 = vmatprep.subr.bf16.mxu0 %v297
    %341 = vmatpush1.bf16.msra.mxu0 %v296
    %342 = vmatprep.subr.bf16.mxu0 %v299
    %343 = vmatpush1.bf16.msra.mxu0 %v298
    %344 = vmatprep.subr.bf16.mxu0 %v301
    %345 = vmatpush1.bf16.msra.mxu0 %v300
    %346 = vmatprep.subr.bf16.mxu0 %v303
    %347 = vmatpush1.bf16.msra.mxu0 %v302
    %348 = vmatprep.subr.bf16.mxu0 %v305
    %349 = vmatpush1.bf16.msra.mxu0 %v304
    %350 = vmatprep.subr.bf16.mxu0 %v307
    %351 = vmatpush1.bf16.msra.mxu0 %v306
    %352 = vmatprep.subr.bf16.mxu0 %v332
    %353 = vmatpush1.bf16.msra.mxu0 %v329
    %354 = vmatprep.subr.bf16.mxu0 0
    %355 = vmatpush1.bf16.msra.mxu0 0
    %356 = vmatprep.subr.bf16.mxu0 0
    %357 = vmatpush1.bf16.msra.mxu0 0
    %358 = vmatprep.subr.bf16.mxu0 0
    %359 = vmatpush1.bf16.msra.mxu0 0
    %360 = vmatprep.subr.bf16.mxu0 0
    %361 = vmatpush1.bf16.msra.mxu0 0
    %362 = vmatprep.subr.bf16.mxu0 0
    %363 = vmatpush1.bf16.msra.mxu0 0
    %364 = vmatprep.subr.bf16.mxu0 0
    %365 = vmatpush1.bf16.msra.mxu0 0
    %366 = vmatprep.mubr.bf16.mxu0 %v158
    %367 = vmatmul.mubr.bf16.gmra.mrb[0].mxu0 %v58
    %v368 = vpop.f32.mrb[0].mxu0
    %v369 = vadd.f32 %v45, %v368
    %v370 = vpop.f32.mrb[0].mxu0
    %v371 = vadd.f32 %v49, %v370
    %v372 = vpop.f32.mrb[0].mxu0
    %v373 = vadd.f32 %v45, %v372
    %v374 = vpop.f32.mrb[0].mxu0
    %v375 = vadd.f32 %v49, %v374
    %376 = vdwg.mxu0
    %v377 = vmax.f32 %v205, %v369
    %v378 = vmax.f32 %v207, %v371
    %v379 = vmax.f32 %v209, %v373
    %v380 = vmax.f32 %v211, %v375
    %s381 = scalar_lea.vmem %s1, 304
    %v382 = vld [vmem:[%s381] sm:$0xff]
    %v383 = vld [vmem:[%s381 + $0x8] sm:$0xff]
    %v384 = vld [vmem:[%s381 + $0x10] sm:$0xff]
    %v385 = vld [vmem:[%s381 + $0x18] sm:$0xff]
    %v386 = vld [vmem:[%s381 + $0x20] sm:$0xff]
    %v387 = vld [vmem:[%s381 + $0x28] sm:$0xff]
    %v388 = vld [vmem:[%s381 + $0x30] sm:$0xff]
    %v389 = vld [vmem:[%s381 + $0x38] sm:$0xff]
    %v390 = vld [vmem:[%s381 + $0x40] sm:$0xff]
    %v391 = vld [vmem:[%s381 + $0x48] sm:$0xff]
    %v392 = vld [vmem:[%s381 + $0x50] sm:$0xff]
    %v393 = vld [vmem:[%s381 + $0x58] sm:$0xff]
    %v394 = vld [vmem:[%s381 + $0x60] sm:$0xff]
    %v395 = vld [vmem:[%s381 + $0x68] sm:$0xff]
    %v396 = vld [vmem:[%s381 + $0x70] sm:$0xff]
    %v397 = vld [vmem:[%s381 + $0x78] sm:$0xff]
    %v398 = vld [vmem:[%s381 + $0x80] sm:$0xff]
    %v399 = vld [vmem:[%s381 + $0x88] sm:$0xff]
    %v400 = vld [vmem:[%s381 + $0x90] sm:$0x33]
    %v420 = vunpack.c.l.b16 %v382
    %v421 = vunpack.c.h.b16 %v382
    %v422 = vunpack.c.l.b16 %v383
    %v423 = vunpack.c.h.b16 %v383
    %v424 = vunpack.c.l.b16 %v384
    %v425 = vunpack.c.h.b16 %v384
    %v426 = vunpack.c.l.b16 %v385
    %v427 = vunpack.c.h.b16 %v385
    %v428 = vunpack.c.l.b16 %v386
    %v429 = vunpack.c.h.b16 %v386
    %v430 = vunpack.c.l.b16 %v387
    %v431 = vunpack.c.h.b16 %v387
    %v432 = vunpack.c.l.b16 %v388
    %v433 = vunpack.c.h.b16 %v388
    %v434 = vunpack.c.l.b16 %v389
    %v435 = vunpack.c.h.b16 %v389
    %v436 = vunpack.c.l.b16 %v390
    %v437 = vunpack.c.h.b16 %v390
    %v438 = vunpack.c.l.b16 %v391
    %v439 = vunpack.c.h.b16 %v391
    %v440 = vunpack.c.l.b16 %v392
    %v441 = vunpack.c.h.b16 %v392
    %v442 = vunpack.c.l.b16 %v393
    %v443 = vunpack.c.h.b16 %v393
    %v444 = vunpack.c.l.b16 %v394
    %v445 = vunpack.c.h.b16 %v394
    %v446 = vunpack.c.l.b16 %v395
    %v447 = vunpack.c.h.b16 %v395
    %v448 = vunpack.c.l.b16 %v396
    %v449 = vunpack.c.h.b16 %v396
    %v450 = vunpack.c.l.b16 %v397
    %v451 = vunpack.c.h.b16 %v397
    %v452 = vunpack.c.l.b16 %v398
    %v453 = vunpack.c.h.b16 %v398
    %v454 = vunpack.c.l.b16 %v399
    %v455 = vunpack.c.h.b16 %v399
    %v456 = vunpack.c.l.b16 %v400
    %v457 = vunpack.c.h.b16 %v400
    %v458 = vpack.c.b16 %v422, %v420
    %v459 = vpack.c.b16 %v423, %v421
    %v460 = vpack.c.b16 %v426, %v424
    %v461 = vpack.c.b16 %v427, %v425
    %v462 = vpack.c.b16 %v430, %v428
    %v463 = vpack.c.b16 %v431, %v429
    %v464 = vpack.c.b16 %v434, %v432
    %v465 = vpack.c.b16 %v435, %v433
    %v466 = vpack.c.b16 %v438, %v436
    %v467 = vpack.c.b16 %v439, %v437
    %v468 = vpack.c.b16 %v442, %v440
    %v469 = vpack.c.b16 %v443, %v441
    %v470 = vpack.c.b16 %v446, %v444
    %v471 = vpack.c.b16 %v447, %v445
    %v472 = vpack.c.b16 %v450, %v448
    %v473 = vpack.c.b16 %v451, %v449
    %v474 = vpack.c.b16 %v454, %v452
    %v475 = vpack.c.b16 %v455, %v453
    %v476 = vpack.c.b16 %v456, %v456
    %v477 = vpack.c.b16 %v457, %v457
    %v497 = vand.u32 %v476, %v163
    %v500 = vand.u32 %v477, %v163
    %502 = vmatprep.subr.bf16.mxu0 %v459
    %503 = vmatpush1.bf16.msra.mxu0 %v458
    %504 = vmatprep.subr.bf16.mxu0 %v461
    %505 = vmatpush1.bf16.msra.mxu0 %v460
    %506 = vmatprep.subr.bf16.mxu0 %v463
    %507 = vmatpush1.bf16.msra.mxu0 %v462
    %508 = vmatprep.subr.bf16.mxu0 %v465
    %509 = vmatpush1.bf16.msra.mxu0 %v464
    %510 = vmatprep.subr.bf16.mxu0 %v467
    %511 = vmatpush1.bf16.msra.mxu0 %v466
    %512 = vmatprep.subr.bf16.mxu0 %v469
    %513 = vmatpush1.bf16.msra.mxu0 %v468
    %514 = vmatprep.subr.bf16.mxu0 %v471
    %515 = vmatpush1.bf16.msra.mxu0 %v470
    %516 = vmatprep.subr.bf16.mxu0 %v473
    %517 = vmatpush1.bf16.msra.mxu0 %v472
    %518 = vmatprep.subr.bf16.mxu0 %v475
    %519 = vmatpush1.bf16.msra.mxu0 %v474
    %520 = vmatprep.subr.bf16.mxu0 %v500
    %521 = vmatpush1.bf16.msra.mxu0 %v497
    %522 = vmatprep.subr.bf16.mxu0 0
    %523 = vmatpush1.bf16.msra.mxu0 0
    %524 = vmatprep.subr.bf16.mxu0 0
    %525 = vmatpush1.bf16.msra.mxu0 0
    %526 = vmatprep.subr.bf16.mxu0 0
    %527 = vmatpush1.bf16.msra.mxu0 0
    %528 = vmatprep.subr.bf16.mxu0 0
    %529 = vmatpush1.bf16.msra.mxu0 0
    %530 = vmatprep.subr.bf16.mxu0 0
    %531 = vmatpush1.bf16.msra.mxu0 0
    %532 = vmatprep.subr.bf16.mxu0 0
    %533 = vmatpush1.bf16.msra.mxu0 0
    %534 = vmatprep.mubr.bf16.mxu0 %v158
    %535 = vmatmul.mubr.bf16.gmra.mrb[0].mxu0 %v58
    %v536 = vpop.f32.mrb[0].mxu0
    %v537 = vadd.f32 %v45, %v536
    %v538 = vpop.f32.mrb[0].mxu0
    %v539 = vadd.f32 %v49, %v538
    %v540 = vpop.f32.mrb[0].mxu0
    %v541 = vadd.f32 %v45, %v540
    %v542 = vpop.f32.mrb[0].mxu0
    %v543 = vadd.f32 %v49, %v542
    %544 = vdwg.mxu0
    %v545 = vmax.f32 %v377, %v537
    %v546 = vmax.f32 %v378, %v539
    %v547 = vmax.f32 %v379, %v541
    %v548 = vmax.f32 %v380, %v543
    %s549 = scalar_lea.vmem %s1, 456
    %v550 = vld [vmem:[%s549] sm:$0xff]
    %v551 = vld [vmem:[%s549 + $0x8] sm:$0xff]
    %v552 = vld [vmem:[%s549 + $0x10] sm:$0xff]
    %v553 = vld [vmem:[%s549 + $0x18] sm:$0xff]
    %v554 = vld [vmem:[%s549 + $0x20] sm:$0xff]
    %v555 = vld [vmem:[%s549 + $0x28] sm:$0xff]
    %v556 = vld [vmem:[%s549 + $0x30] sm:$0xff]
    %v557 = vld [vmem:[%s549 + $0x38] sm:$0xff]
    %v558 = vld [vmem:[%s549 + $0x40] sm:$0xff]
    %v559 = vld [vmem:[%s549 + $0x48] sm:$0xff]
    %v560 = vld [vmem:[%s549 + $0x50] sm:$0xff]
    %v561 = vld [vmem:[%s549 + $0x58] sm:$0xff]
    %v562 = vld [vmem:[%s549 + $0x60] sm:$0xff]
    %v563 = vld [vmem:[%s549 + $0x68] sm:$0xff]
    %v564 = vld [vmem:[%s549 + $0x70] sm:$0xff]
    %v565 = vld [vmem:[%s549 + $0x78] sm:$0xff]
    %v566 = vld [vmem:[%s549 + $0x80] sm:$0xff]
    %v567 = vld [vmem:[%s549 + $0x88] sm:$0xff]
    %v568 = vld [vmem:[%s549 + $0x90] sm:$0x33]
    %v588 = vunpack.c.l.b16 %v550
    %v589 = vunpack.c.h.b16 %v550
    %v590 = vunpack.c.l.b16 %v551
    %v591 = vunpack.c.h.b16 %v551
    %v592 = vunpack.c.l.b16 %v552
    %v593 = vunpack.c.h.b16 %v552
    %v594 = vunpack.c.l.b16 %v553
    %v595 = vunpack.c.h.b16 %v553
    %v596 = vunpack.c.l.b16 %v554
    %v597 = vunpack.c.h.b16 %v554
    %v598 = vunpack.c.l.b16 %v555
    %v599 = vunpack.c.h.b16 %v555
    %v600 = vunpack.c.l.b16 %v556
    %v601 = vunpack.c.h.b16 %v556
    %v602 = vunpack.c.l.b16 %v557
    %v603 = vunpack.c.h.b16 %v557
    %v604 = vunpack.c.l.b16 %v558
    %v605 = vunpack.c.h.b16 %v558
    %v606 = vunpack.c.l.b16 %v559
    %v607 = vunpack.c.h.b16 %v559
    %v608 = vunpack.c.l.b16 %v560
    %v609 = vunpack.c.h.b16 %v560
    %v610 = vunpack.c.l.b16 %v561
    %v611 = vunpack.c.h.b16 %v561
    %v612 = vunpack.c.l.b16 %v562
    %v613 = vunpack.c.h.b16 %v562
    %v614 = vunpack.c.l.b16 %v563
    %v615 = vunpack.c.h.b16 %v563
    %v616 = vunpack.c.l.b16 %v564
    %v617 = vunpack.c.h.b16 %v564
    %v618 = vunpack.c.l.b16 %v565
    %v619 = vunpack.c.h.b16 %v565
    %v620 = vunpack.c.l.b16 %v566
    %v621 = vunpack.c.h.b16 %v566
    %v622 = vunpack.c.l.b16 %v567
    %v623 = vunpack.c.h.b16 %v567
    %v624 = vunpack.c.l.b16 %v568
    %v625 = vunpack.c.h.b16 %v568
    %v626 = vpack.c.b16 %v590, %v588
    %v627 = vpack.c.b16 %v591, %v589
    %v628 = vpack.c.b16 %v594, %v592
    %v629 = vpack.c.b16 %v595, %v593
    %v630 = vpack.c.b16 %v598, %v596
    %v631 = vpack.c.b16 %v599, %v597
    %v632 = vpack.c.b16 %v602, %v600
    %v633 = vpack.c.b16 %v603, %v601
    %v634 = vpack.c.b16 %v606, %v604
    %v635 = vpack.c.b16 %v607, %v605
    %v636 = vpack.c.b16 %v610, %v608
    %v637 = vpack.c.b16 %v611, %v609
    %v638 = vpack.c.b16 %v614, %v612
    %v639 = vpack.c.b16 %v615, %v613
    %v640 = vpack.c.b16 %v618, %v616
    %v641 = vpack.c.b16 %v619, %v617
    %v642 = vpack.c.b16 %v622, %v620
    %v643 = vpack.c.b16 %v623, %v621
    %v644 = vpack.c.b16 %v624, %v624
    %v645 = vpack.c.b16 %v625, %v625
    %v665 = vand.u32 %v644, %v163
    %v668 = vand.u32 %v645, %v163
    %670 = vmatprep.subr.bf16.mxu0 %v627
    %671 = vmatpush1.bf16.msra.mxu0 %v626
    %672 = vmatprep.subr.bf16.mxu0 %v629
    %673 = vmatpush1.bf16.msra.mxu0 %v628
    %674 = vmatprep.subr.bf16.mxu0 %v631
    %675 = vmatpush1.bf16.msra.mxu0 %v630
    %676 = vmatprep.subr.bf16.mxu0 %v633
    %677 = vmatpush1.bf16.msra.mxu0 %v632
    %678 = vmatprep.subr.bf16.mxu0 %v635
    %679 = vmatpush1.bf16.msra.mxu0 %v634
    %680 = vmatprep.subr.bf16.mxu0 %v637
    %681 = vmatpush1.bf16.msra.mxu0 %v636
    %682 = vmatprep.subr.bf16.mxu0 %v639
    %683 = vmatpush1.bf16.msra.mxu0 %v638
    %684 = vmatprep.subr.bf16.mxu0 %v641
    %685 = vmatpush1.bf16.msra.mxu0 %v640
    %686 = vmatprep.subr.bf16.mxu0 %v643
    %687 = vmatpush1.bf16.msra.mxu0 %v642
    %688 = vmatprep.subr.bf16.mxu0 %v668
    %689 = vmatpush1.bf16.msra.mxu0 %v665
    %690 = vmatprep.subr.bf16.mxu0 0
    %691 = vmatpush1.bf16.msra.mxu0 0
    %692 = vmatprep.subr.bf16.mxu0 0
    %693 = vmatpush1.bf16.msra.mxu0 0
    %694 = vmatprep.subr.bf16.mxu0 0
    %695 = vmatpush1.bf16.msra.mxu0 0
    %696 = vmatprep.subr.bf16.mxu0 0
    %697 = vmatpush1.bf16.msra.mxu0 0
    %698 = vmatprep.subr.bf16.mxu0 0
    %699 = vmatpush1.bf16.msra.mxu0 0
    %700 = vmatprep.subr.bf16.mxu0 0
    %701 = vmatpush1.bf16.msra.mxu0 0
    %702 = vmatprep.mubr.bf16.mxu0 %v158
    %703 = vmatmul.mubr.bf16.gmra.mrb[0].mxu0 %v58
    %v704 = vpop.f32.mrb[0].mxu0
    %v705 = vadd.f32 %v45, %v704
    %v706 = vpop.f32.mrb[0].mxu0
    %v707 = vadd.f32 %v49, %v706
    %v708 = vpop.f32.mrb[0].mxu0
    %v709 = vadd.f32 %v45, %v708
    %v710 = vpop.f32.mrb[0].mxu0
    %v711 = vadd.f32 %v49, %v710
    %712 = vdwg.mxu0
    %v713 = vmax.f32 %v545, %v705
    %v714 = vmax.f32 %v546, %v707
    %v715 = vmax.f32 %v547, %v709
    %v716 = vmax.f32 %v548, %v711
    %v717 = vmax.f32 %v713, 0.0
    %v718 = vmax.f32 %v714, 0.0
    %v719 = vmax.f32 %v715, 0.0
    %v720 = vmax.f32 %v716, 0.0
    %v721 = vpack.c.bf16 %v719, %v717
    %v722 = vpack.c.bf16 %v720, %v718
    %v723 = vld [vmem:[%s2] sm:$0xf]
    %v724 = vld [vmem:[%s2 + $0x4] sm:$0xf]
    %v725 = vld [vmem:[%s2 + $0x8] sm:$0xf]
    %v726 = vld [vmem:[%s2 + $0xc] sm:$0xf]
    %v727 = vld [vmem:[%s2 + $0x10] sm:$0xf]
    %v728 = vld [vmem:[%s2 + $0x14] sm:$0xf]
    %v729 = vld [vmem:[%s2 + $0x18] sm:$0xf]
    %v730 = vld [vmem:[%s2 + $0x1c] sm:$0xf]
    %v731 = vld [vmem:[%s2 + $0x20] sm:$0xf]
    %v732 = vld [vmem:[%s2 + $0x24] sm:$0xf]
    %v733 = vld [vmem:[%s2 + $0x28] sm:$0xf]
    %v734 = vld [vmem:[%s2 + $0x2c] sm:$0xf]
    %v735 = vld [vmem:[%s2 + $0x30] sm:$0xf]
    %v736 = vld [vmem:[%s2 + $0x34] sm:$0xf]
    %v737 = vld [vmem:[%s2 + $0x38] sm:$0xf]
    %v738 = vld [vmem:[%s2 + $0x3c] sm:$0xf]
    %v739 = vld [vmem:[%s2 + $0x40] sm:$0xf]
    %v740 = vld [vmem:[%s2 + $0x44] sm:$0xf]
    %v741 = vld [vmem:[%s3 + $0x1] ss:$0 sm:$0xff]
    %v760 = vunpack.c.l.b16 %v723
    %v761 = vunpack.c.l.b16 %v724
    %v762 = vunpack.c.l.b16 %v725
    %v763 = vunpack.c.l.b16 %v726
    %v764 = vunpack.c.l.b16 %v727
    %v765 = vunpack.c.l.b16 %v728
    %v766 = vunpack.c.l.b16 %v729
    %v767 = vunpack.c.l.b16 %v730
    %v768 = vunpack.c.l.b16 %v731
    %v769 = vunpack.c.l.b16 %v732
    %v770 = vunpack.c.l.b16 %v733
    %v771 = vunpack.c.l.b16 %v734
    %v772 = vunpack.c.l.b16 %v735
    %v773 = vunpack.c.l.b16 %v736
    %v774 = vunpack.c.l.b16 %v737
    %v775 = vunpack.c.l.b16 %v738
    %v776 = vunpack.c.l.b16 %v739
    %v777 = vunpack.c.l.b16 %v740
    %v778 = vpack.c.b16 %v761, %v760
    %v779 = vpack.c.b16 %v763, %v762
    %v780 = vpack.c.b16 %v765, %v764
    %v781 = vpack.c.b16 %v767, %v766
    %v782 = vpack.c.b16 %v769, %v768
    %v783 = vpack.c.b16 %v771, %v770
    %v784 = vpack.c.b16 %v773, %v772
    %v785 = vpack.c.b16 %v775, %v774
    %v786 = vpack.c.b16 %v777, %v776
    %vm796 = vcmask 130048
    %v798 = vsel %vm796, %v722, 0
    %800 = vmatprep.subr.bf16.mxu0 0
    %801 = vmatpush1.bf16.msra.mxu0 %v778
    %802 = vmatprep.subr.bf16.mxu0 0
    %803 = vmatpush1.bf16.msra.mxu0 %v779
    %804 = vmatprep.subr.bf16.mxu0 0
    %805 = vmatpush1.bf16.msra.mxu0 %v780
    %806 = vmatprep.subr.bf16.mxu0 0
    %807 = vmatpush1.bf16.msra.mxu0 %v781
    %808 = vmatprep.subr.bf16.mxu0 0
    %809 = vmatpush1.bf16.msra.mxu0 %v782
    %810 = vmatprep.subr.bf16.mxu0 0
    %811 = vmatpush1.bf16.msra.mxu0 %v783
    %812 = vmatprep.subr.bf16.mxu0 0
    %813 = vmatpush1.bf16.msra.mxu0 %v784
    %814 = vmatprep.subr.bf16.mxu0 0
    %815 = vmatpush1.bf16.msra.mxu0 %v785
    %816 = vmatprep.subr.bf16.mxu0 0
    %817 = vmatpush1.bf16.msra.mxu0 %v786
    %818 = vmatprep.subr.bf16.mxu0 0
    %819 = vmatpush1.bf16.msra.mxu0 0
    %820 = vmatprep.subr.bf16.mxu0 0
    %821 = vmatpush1.bf16.msra.mxu0 0
    %822 = vmatprep.subr.bf16.mxu0 0
    %823 = vmatpush1.bf16.msra.mxu0 0
    %824 = vmatprep.subr.bf16.mxu0 0
    %825 = vmatpush1.bf16.msra.mxu0 0
    %826 = vmatprep.subr.bf16.mxu0 0
    %827 = vmatpush1.bf16.msra.mxu0 0
    %828 = vmatprep.subr.bf16.mxu0 0
    %829 = vmatpush1.bf16.msra.mxu0 0
    %830 = vmatprep.subr.bf16.mxu0 0
    %831 = vmatpush1.bf16.msra.mxu0 0
    %832 = vmatprep.mubr.bf16.mxu0 %v798
    %833 = vmatmul.mubr.bf16.gmra.mrb[0].mxu0 %v721
    %v834 = vpop.f32.mrb[0].mxu0
    %v835 = vadd.f32 %v741, %v834
    %v836 = vpop.f32.mrb[0].mxu0
    %v837 = vpop.f32.mrb[0].mxu0
    %v838 = vadd.f32 %v741, %v837
    %v839 = vpop.f32.mrb[0].mxu0
    %840 = vdwg.mxu0
    %v841 = vmax.f32 %v835, 0.0
    %v842 = vmax.f32 %v838, 0.0
    %v843 = vpack.c.bf16 %v842, %v841
    %v844 = vld [vmem:[%s2 + $0x48] sm:$0xf]
    %v845 = vld [vmem:[%s2 + $0x4c] sm:$0xf]
    %v846 = vld [vmem:[%s2 + $0x50] sm:$0xf]
    %v847 = vld [vmem:[%s2 + $0x54] sm:$0xf]
    %v848 = vld [vmem:[%s2 + $0x58] sm:$0xf]
    %v849 = vld [vmem:[%s2 + $0x5c] sm:$0xf]
    %v850 = vld [vmem:[%s2 + $0x60] sm:$0xf]
    %v851 = vld [vmem:[%s2 + $0x64] sm:$0xf]
    %v852 = vld [vmem:[%s2 + $0x68] sm:$0xf]
    %v853 = vld [vmem:[%s2 + $0x6c] sm:$0xf]
    %v854 = vld [vmem:[%s2 + $0x70] sm:$0xf]
    %v855 = vld [vmem:[%s2 + $0x74] sm:$0xf]
    %v856 = vld [vmem:[%s2 + $0x78] sm:$0xf]
    %v857 = vld [vmem:[%s2 + $0x7c] sm:$0xf]
    %v858 = vld [vmem:[%s2 + $0x80] sm:$0xf]
    %v859 = vld [vmem:[%s2 + $0x84] sm:$0xf]
    %v860 = vld [vmem:[%s3 + $0x2] ss:$0 sm:$0xff]
    %v877 = vunpack.c.l.b16 %v844
    %v878 = vunpack.c.l.b16 %v845
    %v879 = vunpack.c.l.b16 %v846
    %v880 = vunpack.c.l.b16 %v847
    %v881 = vunpack.c.l.b16 %v848
    %v882 = vunpack.c.l.b16 %v849
    %v883 = vunpack.c.l.b16 %v850
    %v884 = vunpack.c.l.b16 %v851
    %v885 = vunpack.c.l.b16 %v852
    %v886 = vunpack.c.l.b16 %v853
    %v887 = vunpack.c.l.b16 %v854
    %v888 = vunpack.c.l.b16 %v855
    %v889 = vunpack.c.l.b16 %v856
    %v890 = vunpack.c.l.b16 %v857
    %v891 = vunpack.c.l.b16 %v858
    %v892 = vunpack.c.l.b16 %v859
    %v893 = vpack.c.b16 %v878, %v877
    %v894 = vpack.c.b16 %v880, %v879
    %v895 = vpack.c.b16 %v882, %v881
    %v896 = vpack.c.b16 %v884, %v883
    %v897 = vpack.c.b16 %v886, %v885
    %v898 = vpack.c.b16 %v888, %v887
    %v899 = vpack.c.b16 %v890, %v889
    %v900 = vpack.c.b16 %v892, %v891
    %909 = vmatprep.subr.bf16.mxu0 0
    %910 = vmatpush1.bf16.msra.mxu0 %v893
    %911 = vmatprep.subr.bf16.mxu0 0
    %912 = vmatpush1.bf16.msra.mxu0 %v894
    %913 = vmatprep.subr.bf16.mxu0 0
    %914 = vmatpush1.bf16.msra.mxu0 %v895
    %915 = vmatprep.subr.bf16.mxu0 0
    %916 = vmatpush1.bf16.msra.mxu0 %v896
    %917 = vmatprep.subr.bf16.mxu0 0
    %918 = vmatpush1.bf16.msra.mxu0 %v897
    %919 = vmatprep.subr.bf16.mxu0 0
    %920 = vmatpush1.bf16.msra.mxu0 %v898
    %921 = vmatprep.subr.bf16.mxu0 0
    %922 = vmatpush1.bf16.msra.mxu0 %v899
    %923 = vmatprep.subr.bf16.mxu0 0
    %924 = vmatpush1.bf16.msra.mxu0 %v900
    %925 = vmatprep.subr.bf16.mxu0 0
    %926 = vmatpush1.bf16.msra.mxu0 0
    %927 = vmatprep.subr.bf16.mxu0 0
    %928 = vmatpush1.bf16.msra.mxu0 0
    %929 = vmatprep.subr.bf16.mxu0 0
    %930 = vmatpush1.bf16.msra.mxu0 0
    %931 = vmatprep.subr.bf16.mxu0 0
    %932 = vmatpush1.bf16.msra.mxu0 0
    %933 = vmatprep.subr.bf16.mxu0 0
    %934 = vmatpush1.bf16.msra.mxu0 0
    %935 = vmatprep.subr.bf16.mxu0 0
    %936 = vmatpush1.bf16.msra.mxu0 0
    %937 = vmatprep.subr.bf16.mxu0 0
    %938 = vmatpush1.bf16.msra.mxu0 0
    %939 = vmatprep.subr.bf16.mxu0 0
    %940 = vmatpush1.bf16.msra.mxu0 0
    %941 = vmatprep.mubr.bf16.mxu0 0
    %942 = vmatmul.mubr.bf16.gmra.mrb[0].mxu0 %v843
    %v943 = vpop.f32.mrb[0].mxu0
    %v944 = vadd.f32 %v860, %v943
    %v945 = vpop.f32.mrb[0].mxu0
    %v946 = vpop.f32.mrb[0].mxu0
    %v947 = vadd.f32 %v860, %v946
    %v948 = vpop.f32.mrb[0].mxu0
    %949 = vdwg.mxu0
    %v950 = vmax.f32 %v944, 0.0
    %v951 = vmax.f32 %v947, 0.0
    %v952 = vpack.c.bf16 %v951, %v950
    %v953 = vld [vmem:[%s2 + $0x88] sm:$0xf]
    %v954 = vld [vmem:[%s2 + $0x8c] sm:$0xf]
    %v955 = vld [vmem:[%s2 + $0x90] sm:$0xf]
    %v956 = vld [vmem:[%s2 + $0x94] sm:$0xf]
    %v957 = vld [vmem:[%s2 + $0x98] sm:$0xf]
    %v958 = vld [vmem:[%s2 + $0x9c] sm:$0xf]
    %v959 = vld [vmem:[%s2 + $0xa0] sm:$0xf]
    %v960 = vld [vmem:[%s2 + $0xa4] sm:$0xf]
    %v961 = vld [vmem:[%s3 + $0x3] ss:$0 sm:$0xff]
    %v970 = vunpack.c.l.b16 %v953
    %v971 = vunpack.c.l.b16 %v954
    %v972 = vunpack.c.l.b16 %v955
    %v973 = vunpack.c.l.b16 %v956
    %v974 = vunpack.c.l.b16 %v957
    %v975 = vunpack.c.l.b16 %v958
    %v976 = vunpack.c.l.b16 %v959
    %v977 = vunpack.c.l.b16 %v960
    %v978 = vpack.c.b16 %v971, %v970
    %v979 = vpack.c.b16 %v973, %v972
    %v980 = vpack.c.b16 %v975, %v974
    %v981 = vpack.c.b16 %v977, %v976
    %vm986 = vcmask 523264
    %v988 = vsel %vm986, %v952, 0
    %990 = vmatprep.subr.bf16.mxu0 0
    %991 = vmatpush1.bf16.msra.mxu0 %v978
    %992 = vmatprep.subr.bf16.mxu0 0
    %993 = vmatpush1.bf16.msra.mxu0 %v979
    %994 = vmatprep.subr.bf16.mxu0 0
    %995 = vmatpush1.bf16.msra.mxu0 %v980
    %996 = vmatprep.subr.bf16.mxu0 0
    %997 = vmatpush1.bf16.msra.mxu0 %v981
    %998 = vmatprep.subr.bf16.mxu0 0
    %999 = vmatpush1.bf16.msra.mxu0 0
    %1000 = vmatprep.subr.bf16.mxu0 0
    %1001 = vmatpush1.bf16.msra.mxu0 0
    %1002 = vmatprep.subr.bf16.mxu0 0
    %1003 = vmatpush1.bf16.msra.mxu0 0
    %1004 = vmatprep.subr.bf16.mxu0 0
    %1005 = vmatpush1.bf16.msra.mxu0 0
    %1006 = vmatprep.subr.bf16.mxu0 0
    %1007 = vmatpush1.bf16.msra.mxu0 0
    %1008 = vmatprep.subr.bf16.mxu0 0
    %1009 = vmatpush1.bf16.msra.mxu0 0
    %1010 = vmatprep.subr.bf16.mxu0 0
    %1011 = vmatpush1.bf16.msra.mxu0 0
    %1012 = vmatprep.subr.bf16.mxu0 0
    %1013 = vmatpush1.bf16.msra.mxu0 0
    %1014 = vmatprep.subr.bf16.mxu0 0
    %1015 = vmatpush1.bf16.msra.mxu0 0
    %1016 = vmatprep.subr.bf16.mxu0 0
    %1017 = vmatpush1.bf16.msra.mxu0 0
    %1018 = vmatprep.subr.bf16.mxu0 0
    %1019 = vmatpush1.bf16.msra.mxu0 0
    %1020 = vmatprep.subr.bf16.mxu0 0
    %1021 = vmatpush1.bf16.msra.mxu0 0
    %1022 = vmatprep.mubr.bf16.mxu0 0
    %1023 = vmatmul.mubr.bf16.gmra.mrb[0].mxu0 %v988
    %v1024 = vpop.f32.mrb[0].mxu0
    %v1025 = vadd.f32 %v961, %v1024
    %v1026 = vpop.f32.mrb[0].mxu0
    %v1027 = vpop.f32.mrb[0].mxu0
    %v1028 = vadd.f32 %v961, %v1027
    %v1029 = vpop.f32.mrb[0].mxu0
    %1030 = vdwg.mxu0
    %v1031 = vtanh.pop %v1025
    %v1032 = vtanh.pop %v1028
    %v1033 = vpack.c.bf16 %v1032, %v1031
    %v1034 = vld [vmem:[%s2 + $0xa8] sm:$0xf]
    %v1035 = vld [vmem:[%s2 + $0xac] sm:$0xf]
    %v1036 = vld [vmem:[%s2 + $0xb0] sm:$0xf]
    %v1037 = vld [vmem:[%s2 + $0xb4] sm:$0xf]
    %v1038 = vld [vmem:[%s2 + $0xb8] sm:$0xf]
    %v1039 = vld [vmem:[%s2 + $0xbc] sm:$0xf]
    %v1040 = vld [vmem:[%s2 + $0xc0] sm:$0xf]
    %v1041 = vld [vmem:[%s2 + $0xc4] sm:$0xf]
    %v1042 = vld [vmem:[%s2 + $0xc8] sm:$0xf]
    %v1043 = vld [vmem:[%s2 + $0xcc] sm:$0xf]
    %v1044 = vld [vmem:[%s2 + $0xd0] sm:$0xf]
    %v1045 = vld [vmem:[%s2 + $0xd4] sm:$0xf]
    %v1046 = vld [vmem:[%s2 + $0xd8] sm:$0xf]
    %v1047 = vld [vmem:[%s2 + $0xdc] sm:$0xf]
    %v1048 = vld [vmem:[%s2 + $0xe0] sm:$0xf]
    %v1049 = vld [vmem:[%s2 + $0xe4] sm:$0xf]
    %v1050 = vld [vmem:[%s3 + $0x4] ss:$0 sm:$0xff]
    %v1067 = vunpack.c.l.b16 %v1034
    %v1068 = vunpack.c.l.b16 %v1035
    %v1069 = vunpack.c.l.b16 %v1036
    %v1070 = vunpack.c.l.b16 %v1037
    %v1071 = vunpack.c.l.b16 %v1038
    %v1072 = vunpack.c.l.b16 %v1039
    %v1073 = vunpack.c.l.b16 %v1040
    %v1074 = vunpack.c.l.b16 %v1041
    %v1075 = vunpack.c.l.b16 %v1042
    %v1076 = vunpack.c.l.b16 %v1043
    %v1077 = vunpack.c.l.b16 %v1044
    %v1078 = vunpack.c.l.b16 %v1045
    %v1079 = vunpack.c.l.b16 %v1046
    %v1080 = vunpack.c.l.b16 %v1047
    %v1081 = vunpack.c.l.b16 %v1048
    %v1082 = vunpack.c.l.b16 %v1049
    %v1083 = vpack.c.b16 %v1068, %v1067
    %v1084 = vpack.c.b16 %v1070, %v1069
    %v1085 = vpack.c.b16 %v1072, %v1071
    %v1086 = vpack.c.b16 %v1074, %v1073
    %v1087 = vpack.c.b16 %v1076, %v1075
    %v1088 = vpack.c.b16 %v1078, %v1077
    %v1089 = vpack.c.b16 %v1080, %v1079
    %v1090 = vpack.c.b16 %v1082, %v1081
    %1099 = vmatprep.subr.bf16.mxu0 0
    %1100 = vmatpush1.bf16.msra.mxu0 %v1083
    %1101 = vmatprep.subr.bf16.mxu0 0
    %1102 = vmatpush1.bf16.msra.mxu0 %v1084
    %1103 = vmatprep.subr.bf16.mxu0 0
    %1104 = vmatpush1.bf16.msra.mxu0 %v1085
    %1105 = vmatprep.subr.bf16.mxu0 0
    %1106 = vmatpush1.bf16.msra.mxu0 %v1086
    %1107 = vmatprep.subr.bf16.mxu0 0
    %1108 = vmatpush1.bf16.msra.mxu0 %v1087
    %1109 = vmatprep.subr.bf16.mxu0 0
    %1110 = vmatpush1.bf16.msra.mxu0 %v1088
    %1111 = vmatprep.subr.bf16.mxu0 0
    %1112 = vmatpush1.bf16.msra.mxu0 %v1089
    %1113 = vmatprep.subr.bf16.mxu0 0
    %1114 = vmatpush1.bf16.msra.mxu0 %v1090
    %1115 = vmatprep.subr.bf16.mxu0 0
    %1116 = vmatpush1.bf16.msra.mxu0 0
    %1117 = vmatprep.subr.bf16.mxu0 0
    %1118 = vmatpush1.bf16.msra.mxu0 0
    %1119 = vmatprep.subr.bf16.mxu0 0
    %1120 = vmatpush1.bf16.msra.mxu0 0
    %1121 = vmatprep.subr.bf16.mxu0 0
    %1122 = vmatpush1.bf16.msra.mxu0 0
    %1123 = vmatprep.subr.bf16.mxu0 0
    %1124 = vmatpush1.bf16.msra.mxu0 0
    %1125 = vmatprep.subr.bf16.mxu0 0
    %1126 = vmatpush1.bf16.msra.mxu0 0
    %1127 = vmatprep.subr.bf16.mxu0 0
    %1128 = vmatpush1.bf16.msra.mxu0 0
    %1129 = vmatprep.subr.bf16.mxu0 0
    %1130 = vmatpush1.bf16.msra.mxu0 0
    %1131 = vmatprep.mubr.bf16.mxu0 0
    %1132 = vmatmul.mubr.bf16.gmra.mrb[0].mxu0 %v1033
    %v1133 = vpop.f32.mrb[0].mxu0
    %v1134 = vadd.f32 %v1050, %v1133
    %v1135 = vpop.f32.mrb[0].mxu0
    %v1136 = vpop.f32.mrb[0].mxu0
    %v1137 = vadd.f32 %v1050, %v1136
    %v1138 = vpop.f32.mrb[0].mxu0
    %1139 = vdwg.mxu0
    %v1140 = vlaneseq
    %v1141 = vand.u32 %v1140, 127
    %vm1142 = vcmp.lt.s32.totalorder %v1141, 7
    %v1143 = vsel %vm1142, %v1134, -1e+30
    %v1144 = vsel %vm1142, %v1137, -1e+30
    %1145 = vmax.xlane.f32.xlu0 %v1143
    %v1146 = vpop.xlane.xlu0 %1145
    %1147 = vmax.xlane.f32.xlu0 %v1144
    %v1148 = vpop.xlane.xlu0 %1147
    %v1149 = vsub.f32 %v1143, %v1146
    %v1150 = vsub.f32 %v1144, %v1148
    %v1151 = vmul.f32 %v1149, 1.442695
    %v1152 = vpow.pop %v1151
    %v1153 = vmul.f32 %v1150, 1.442695
    %v1154 = vpow.pop %v1153
    %1155 = vadd.xlane.f32.xlu0 %v1152
    %v1156 = vpop.xlane.xlu0 %1155
    %1157 = vadd.xlane.f32.xlu0 %v1154
    %v1158 = vpop.xlane.xlu0 %1157
    %v1159 = vlog2.pop %v1156
    %v1160 = vmul.f32 %v1159, 0.6931472
    %v1161 = vlog2.pop %v1158
    %v1162 = vmul.f32 %v1161, 0.6931472
    %v1163 = vadd.f32 %v1146, %v1160
    %v1164 = vadd.f32 %v1148, %v1162
    %v1165 = vsub.f32 %v1134, %v1163
    %v1166 = vsub.f32 %v1137, %v1164
    %v1167 = vsel %vm1142, %v1165, %v1134
    %v1168 = vsel %vm1142, %v1166, %v1137
    %v1169 = vpack.c.bf16 %v1168, %v1167
    %v1171 = vunpack.c.l.b16 %v1169
    %v1172 = vunpack.c.h.b16 %v1169
    %v1173 = vpack.c.b16 %v1171, %v1171
    %v1174 = vpack.c.b16 %v1172, %v1172
    %1177 = vst [vmem:[#allocation2] sm:$0xf] %v1173
    %1178 = vst [vmem:[#allocation2 + $0x4] sm:$0xf] %v1174
    // Predicated region
    $region18: #{tpu_custom_call.1} parent=1 // pred_check
      _
    $region19: #{tpu_custom_call.1} parent=1 // pred_check_branch
      %1180 = sbr.rel (0) target = $region21
    $region20: #{tpu_custom_call.1} parent=1 // pred_region
      %s1182 = ssub.s32 128, 128
      %1183 = vsyncadd [#allocation3], %s1182
      %s1184 = sshll.u32 [#allocation2], 4
      %s1185 = int_to_ptr.vmem [resolvable:$true] %s1184
      %1190 = dma.vmem_to_hbm [thread:$0]  %s1185, 128, %s4, [#allocation3], 64, 64, 4
    $region21: #{tpu_custom_call.1} parent=1 // pred_fallthru
      _
    // Predicated region
    $region22: #{tpu_custom_call.1} parent=1 // pred_check
      _
    $region23: #{tpu_custom_call.1} parent=1 // pred_check_branch
      %1192 = sbr.rel (0) target = $region25
    $region24: #{tpu_custom_call.1} parent=1 // pred_region
      %1193 = dma.done [#allocation3], 128
    $region25: #{tpu_custom_call.1} parent=1 // pred_fallthru
      _
    %1194 = vsyncpa [#allocation3], 1

</llo_original>
